<compile_context>
chip_gen: v5e
topology: v5e:2x2
jax: 0.10.0
libtpu: 0.0.40
codegen_flags: <defaults>
</compile_context>

<pallas_src>
import functools

import jax
import jax.numpy as jnp
from jax.experimental import pallas as pl
from jax.experimental.pallas import tpu as pltpu


def _round_up(x, m):
    return ((x + m - 1) // m) * m


def _lane_partial_sum(x, tk):
    """Reduce (tn, tk) -> (tn, 128) by summing aligned 128-lane chunks.

    Aligned lane slices stay within whole vregs, so this is pure VPU adds
    (no cross-lane XLU work) in the hot loop.
    """
    acc = x[:, 0:128]
    for j in range(1, tk // 128):
        acc = acc + x[:, j * 128:(j + 1) * 128]
    return acc


def _dice_kernel(pred_ref, tgt_ref, out_ref, inter_sc, union_sc, *, smooth, tk):
    k = pl.program_id(1)

    @pl.when(k == 0)
    def _():
        inter_sc[...] = jnp.zeros_like(inter_sc)
        union_sc[...] = jnp.zeros_like(union_sc)

    p = jax.nn.sigmoid(pred_ref[...].astype(jnp.float32))
    t = tgt_ref[...].astype(jnp.float32)

    # Lane-dense partial accumulation: (tn, 128) full-width stores, no per-step XLU reduce.
    inter_sc[...] += _lane_partial_sum(p * t, tk)
    union_sc[...] += _lane_partial_sum(p + t, tk)

    @pl.when(k == pl.num_programs(1) - 1)
    def _():
        # Single cross-lane reduction per row block, done once in the epilogue.
        inter = jnp.sum(inter_sc[...], axis=1, keepdims=True)
        union = jnp.sum(union_sc[...], axis=1, keepdims=True)
        loss = 1.0 - (2.0 * inter + smooth) / (union + smooth)
        out_ref[...] = loss.astype(out_ref.dtype)


def dice_loss_binary(pred_flat, target_flat, smooth=1.0, *, tn=256, tk=2048):
    """Pallas equivalent of Dice_loss_binary.forward. Returns loss of shape [N] (float32)."""
    N, D = pred_flat.shape
    assert target_flat.shape == (N, D)

    # Clamp tiles to the (padded) problem size; tn multiple of 8, tk multiple of 128.
    tn = min(tn, _round_up(N, 8))
    tk = min(tk, _round_up(D, 128))
    Np = _round_up(N, tn)
    Dp = _round_up(D, tk)

    # Pad the reduction tail exactly: pred pad -> -1e9 so sigmoid -> 0, target pad -> 0.
    if Dp != D:
        pred_flat = jnp.pad(pred_flat, ((0, 0), (0, Dp - D)), constant_values=-1e9)
        target_flat = jnp.pad(target_flat, ((0, 0), (0, Dp - D)))
    # Pad rows with zeros; the extra rows' losses are discarded below.
    if Np != N:
        pred_flat = jnp.pad(pred_flat, ((0, Np - N), (0, 0)))
        target_flat = jnp.pad(target_flat, ((0, Np - N), (0, 0)))

    grid = (Np // tn, Dp // tk)
    kernel = functools.partial(_dice_kernel, smooth=float(smooth), tk=tk)

    out = pl.pallas_call(
        kernel,
        out_shape=jax.ShapeDtypeStruct((Np, 1), jnp.float32),
        grid_spec=pltpu.PrefetchScalarGridSpec(
            num_scalar_prefetch=0,
            grid=grid,
            in_specs=[
                pl.BlockSpec((tn, tk), lambda i, k: (i, k)),
                pl.BlockSpec((tn, tk), lambda i, k: (i, k)),
            ],
            out_specs=pl.BlockSpec((tn, 1), lambda i, k: (i, 0)),
            scratch_shapes=[
                pltpu.VMEM((tn, 128), jnp.float32),
                pltpu.VMEM((tn, 128), jnp.float32),
            ],
        ),
        compiler_params=pltpu.CompilerParams(
            dimension_semantics=("parallel", "arbitrary")),
    )(pred_flat, target_flat)
    return out[:N, 0]


def _reference(pred_flat, target_flat, smooth=1.0):
    p = jax.nn.sigmoid(pred_flat.astype(jnp.float32))
    t = target_flat.astype(jnp.float32)
    inter = jnp.sum(p * t, axis=1)
    union = jnp.sum(p, axis=1) + jnp.sum(t, axis=1)
    return 1.0 - (2.0 * inter + smooth) / (union + smooth)


if __name__ == "__main__":
    key = jax.random.PRNGKey(0)
    k1, k2, k3, k4 = jax.random.split(key, 4)

    # Case 1: batch=2, channels=4, spatial=16x16 -> flattened per-sample dim D = 4*16*16 = 1024
    N, D = 2, 4 * 16 * 16
    pred_flat = jax.random.normal(k1, (N, D), dtype=jnp.float32)
    target_flat = (jax.random.uniform(k2, (N, D)) > 0.5).astype(jnp.float32)

    loss = jax.block_until_ready(dice_loss_binary(pred_flat, target_flat, smooth=1.0))
    ref = _reference(pred_flat, target_flat, smooth=1.0)
    assert loss.shape == (N,)
    assert jnp.allclose(loss, ref, atol=1e-5, rtol=1e-5), (loss, ref)

    # Case 2: non-divisible shapes to exercise the padded/masked tail path.
    N2, D2 = 3, 300
    pred2 = jax.random.normal(k3, (N2, D2), dtype=jnp.float32)
    target2 = (jax.random.uniform(k4, (N2, D2)) > 0.5).astype(jnp.float32)

    loss2 = jax.block_until_ready(dice_loss_binary(pred2, target2, smooth=1.0))
    ref2 = _reference(pred2, target2, smooth=1.0)
    assert loss2.shape == (N2,)
    assert jnp.allclose(loss2, ref2, atol=1e-5, rtol=1e-5), (loss2, ref2)

    print("KERNEL_OK")
</pallas_src>

<mosaic_0001>
module attributes {stable_mosaic.version = 11 : i64} {
  func.func @_dice_kernel(%arg0: i32, %arg1: i32, %arg2: memref<8x1024xf32, #tpu.memory_space<vmem>>, %arg3: memref<8x1024xf32, #tpu.memory_space<vmem>>, %arg4: memref<8x1xf32, #tpu.memory_space<vmem>>, %arg5: memref<8x128xf32, #tpu.memory_space<vmem>>, %arg6: memref<8x128xf32, #tpu.memory_space<vmem>>) attributes {dimension_semantics = [#tpu.dimension_semantics<parallel>, #tpu.dimension_semantics<arbitrary>], iteration_bounds = array<i64: 1, 1>, scalar_prefetch = 0 : i64, scratch_operands = 2 : i64, tpu.core_type = #tpu.core_type<tc>, window_params = [{transform_indices = @transform_0, window_bounds = array<i64: 8, 1024>}, {transform_indices = @transform_1, window_bounds = array<i64: 8, 1024>}, {transform_indices = @transform_2, window_bounds = array<i64: 8, 1>}]} {
    %c0_i32 = arith.constant 0 : i32
    %0 = arith.cmpi eq, %arg1, %c0_i32 : i32
    %1 = arith.extui %0 : i1 to i32
    %c0_i32_0 = arith.constant 0 : i32
    %2 = arith.cmpi ne, %1, %c0_i32_0 : i32
    scf.if %2 {
      %cst_14 = arith.constant 0.000000e+00 : f32
      %51 = vector.broadcast %cst_14 : f32 to vector<8x128xf32>
      %c0_15 = arith.constant 0 : index
      %c0_16 = arith.constant 0 : index
      %52 = vector.load %arg5[%c0_15, %c0_16] : memref<8x128xf32, #tpu.memory_space<vmem>>, vector<8x128xf32>
      tpu.vector_store %arg5[%c0_15, %c0_16], %51 {strides = array<i32>} : memref<8x128xf32, #tpu.memory_space<vmem>>, vector<8x128xf32>,
      %cst_17 = arith.constant 0.000000e+00 : f32
      %53 = vector.broadcast %cst_17 : f32 to vector<8x128xf32>
      %c0_18 = arith.constant 0 : index
      %c0_19 = arith.constant 0 : index
      %54 = vector.load %arg6[%c0_18, %c0_19] : memref<8x128xf32, #tpu.memory_space<vmem>>, vector<8x128xf32>
      tpu.vector_store %arg6[%c0_18, %c0_19], %53 {strides = array<i32>} : memref<8x128xf32, #tpu.memory_space<vmem>>, vector<8x128xf32>,
    } else {
    }
    %c0 = arith.constant 0 : index
    %c0_1 = arith.constant 0 : index
    %3 = vector.load %arg2[%c0, %c0_1] : memref<8x1024xf32, #tpu.memory_space<vmem>>, vector<8x1024xf32>
    %4 = arith.negf %3 : vector<8x1024xf32>
    %5 = math.exp %4 : vector<8x1024xf32>
    %cst = arith.constant 1.000000e+00 : f32
    %6 = vector.broadcast %cst : f32 to vector<8x1024xf32>
    %7 = arith.addf %6, %5 : vector<8x1024xf32>
    %8 = arith.divf %6, %7 : vector<8x1024xf32>
    %c0_2 = arith.constant 0 : index
    %c0_3 = arith.constant 0 : index
    %9 = vector.load %arg3[%c0_2, %c0_3] : memref<8x1024xf32, #tpu.memory_space<vmem>>, vector<8x1024xf32>
    %c0_4 = arith.constant 0 : index
    %c0_5 = arith.constant 0 : index
    %10 = vector.load %arg5[%c0_4, %c0_5] : memref<8x128xf32, #tpu.memory_space<vmem>>, vector<8x128xf32>
    %11 = arith.mulf %8, %9 : vector<8x1024xf32>
    %12 = vector.extract_strided_slice %11 {offsets = [0, 0], sizes = [8, 128], strides = [1, 1]} : vector<8x1024xf32> to vector<8x128xf32>
    %13 = vector.extract_strided_slice %11 {offsets = [0, 128], sizes = [8, 128], strides = [1, 1]} : vector<8x1024xf32> to vector<8x128xf32>
    %14 = arith.addf %12, %13 : vector<8x128xf32>
    %15 = vector.extract_strided_slice %11 {offsets = [0, 256], sizes = [8, 128], strides = [1, 1]} : vector<8x1024xf32> to vector<8x128xf32>
    %16 = arith.addf %14, %15 : vector<8x128xf32>
    %17 = vector.extract_strided_slice %11 {offsets = [0, 384], sizes = [8, 128], strides = [1, 1]} : vector<8x1024xf32> to vector<8x128xf32>
    %18 = arith.addf %16, %17 : vector<8x128xf32>
    %19 = vector.extract_strided_slice %11 {offsets = [0, 512], sizes = [8, 128], strides = [1, 1]} : vector<8x1024xf32> to vector<8x128xf32>
    %20 = arith.addf %18, %19 : vector<8x128xf32>
    %21 = vector.extract_strided_slice %11 {offsets = [0, 640], sizes = [8, 128], strides = [1, 1]} : vector<8x1024xf32> to vector<8x128xf32>
    %22 = arith.addf %20, %21 : vector<8x128xf32>
    %23 = vector.extract_strided_slice %11 {offsets = [0, 768], sizes = [8, 128], strides = [1, 1]} : vector<8x1024xf32> to vector<8x128xf32>
    %24 = arith.addf %22, %23 : vector<8x128xf32>
    %25 = vector.extract_strided_slice %11 {offsets = [0, 896], sizes = [8, 128], strides = [1, 1]} : vector<8x1024xf32> to vector<8x128xf32>
    %26 = arith.addf %24, %25 : vector<8x128xf32>
    %27 = arith.addf %10, %26 : vector<8x128xf32>
    %c0_6 = arith.constant 0 : index
    %c0_7 = arith.constant 0 : index
    %28 = vector.load %arg5[%c0_6, %c0_7] : memref<8x128xf32, #tpu.memory_space<vmem>>, vector<8x128xf32>
    tpu.vector_store %arg5[%c0_6, %c0_7], %27 {strides = array<i32>} : memref<8x128xf32, #tpu.memory_space<vmem>>, vector<8x128xf32>,
    %c0_8 = arith.constant 0 : index
    %c0_9 = arith.constant 0 : index
    %29 = vector.load %arg6[%c0_8, %c0_9] : memref<8x128xf32, #tpu.memory_space<vmem>>, vector<8x128xf32>
    %30 = arith.addf %8, %9 : vector<8x1024xf32>
    %31 = vector.extract_strided_slice %30 {offsets = [0, 0], sizes = [8, 128], strides = [1, 1]} : vector<8x1024xf32> to vector<8x128xf32>
    %32 = vector.extract_strided_slice %30 {offsets = [0, 128], sizes = [8, 128], strides = [1, 1]} : vector<8x1024xf32> to vector<8x128xf32>
    %33 = arith.addf %31, %32 : vector<8x128xf32>
    %34 = vector.extract_strided_slice %30 {offsets = [0, 256], sizes = [8, 128], strides = [1, 1]} : vector<8x1024xf32> to vector<8x128xf32>
    %35 = arith.addf %33, %34 : vector<8x128xf32>
    %36 = vector.extract_strided_slice %30 {offsets = [0, 384], sizes = [8, 128], strides = [1, 1]} : vector<8x1024xf32> to vector<8x128xf32>
    %37 = arith.addf %35, %36 : vector<8x128xf32>
    %38 = vector.extract_strided_slice %30 {offsets = [0, 512], sizes = [8, 128], strides = [1, 1]} : vector<8x1024xf32> to vector<8x128xf32>
    %39 = arith.addf %37, %38 : vector<8x128xf32>
    %40 = vector.extract_strided_slice %30 {offsets = [0, 640], sizes = [8, 128], strides = [1, 1]} : vector<8x1024xf32> to vector<8x128xf32>
    %41 = arith.addf %39, %40 : vector<8x128xf32>
    %42 = vector.extract_strided_slice %30 {offsets = [0, 768], sizes = [8, 128], strides = [1, 1]} : vector<8x1024xf32> to vector<8x128xf32>
    %43 = arith.addf %41, %42 : vector<8x128xf32>
    %44 = vector.extract_strided_slice %30 {offsets = [0, 896], sizes = [8, 128], strides = [1, 1]} : vector<8x1024xf32> to vector<8x128xf32>
    %45 = arith.addf %43, %44 : vector<8x128xf32>
    %46 = arith.addf %29, %45 : vector<8x128xf32>
    %c0_10 = arith.constant 0 : index
    %c0_11 = arith.constant 0 : index
    %47 = vector.load %arg6[%c0_10, %c0_11] : memref<8x128xf32, #tpu.memory_space<vmem>>, vector<8x128xf32>
    tpu.vector_store %arg6[%c0_10, %c0_11], %46 {strides = array<i32>} : memref<8x128xf32, #tpu.memory_space<vmem>>, vector<8x128xf32>,
    %c0_i32_12 = arith.constant 0 : i32
    %48 = arith.cmpi eq, %arg1, %c0_i32_12 : i32
    %49 = arith.extui %48 : i1 to i32
    %c0_i32_13 = arith.constant 0 : i32
    %50 = arith.cmpi ne, %49, %c0_i32_13 : i32
    scf.if %50 {
      %c0_14 = arith.constant 0 : index
      %c0_15 = arith.constant 0 : index
      %51 = vector.load %arg5[%c0_14, %c0_15] : memref<8x128xf32, #tpu.memory_space<vmem>>, vector<8x128xf32>
      %cst_16 = arith.constant dense<0.000000e+00> : vector<8xf32>
      %52 = vector.multi_reduction <add>, %51, %cst_16 [1] : vector<8x128xf32> to vector<8xf32>
      %53 = vector.shape_cast %52 : vector<8xf32> to vector<8x1xf32>
      %c0_17 = arith.constant 0 : index
      %c0_18 = arith.constant 0 : index
      %54 = vector.load %arg6[%c0_17, %c0_18] : memref<8x128xf32, #tpu.memory_space<vmem>>, vector<8x128xf32>
      %cst_19 = arith.constant dense<0.000000e+00> : vector<8xf32>
      %55 = vector.multi_reduction <add>, %54, %cst_19 [1] : vector<8x128xf32> to vector<8xf32>
      %56 = vector.shape_cast %55 : vector<8xf32> to vector<8x1xf32>
      %cst_20 = arith.constant 2.000000e+00 : f32
      %57 = vector.broadcast %cst_20 : f32 to vector<8x1xf32>
      %58 = arith.mulf %57, %53 : vector<8x1xf32>
      %cst_21 = arith.constant 1.000000e+00 : f32
      %59 = vector.broadcast %cst_21 : f32 to vector<8x1xf32>
      %60 = arith.addf %58, %59 : vector<8x1xf32>
      %cst_22 = arith.constant 1.000000e+00 : f32
      %61 = vector.broadcast %cst_22 : f32 to vector<8x1xf32>
      %62 = arith.addf %56, %61 : vector<8x1xf32>
      %63 = arith.divf %60, %62 : vector<8x1xf32>
      %cst_23 = arith.constant 1.000000e+00 : f32
      %64 = vector.broadcast %cst_23 : f32 to vector<8x1xf32>
      %65 = arith.subf %64, %63 : vector<8x1xf32>
      %c0_24 = arith.constant 0 : index
      %c0_25 = arith.constant 0 : index
      %66 = vector.load %arg4[%c0_24, %c0_25] : memref<8x1xf32, #tpu.memory_space<vmem>>, vector<8x1xf32>
      tpu.vector_store %arg4[%c0_24, %c0_25], %65 {strides = array<i32>} : memref<8x1xf32, #tpu.memory_space<vmem>>, vector<8x1xf32>,
    } else {
    }
    return
  }
  func.func @transform_0(%arg0: i32, %arg1: i32) -> (i32, i32) {
    %c0_i32 = arith.constant 0 : i32
    return %arg0, %arg1 : i32, i32
  }
  func.func @transform_1(%arg0: i32, %arg1: i32) -> (i32, i32) {
    %c0_i32 = arith.constant 0 : i32
    return %arg0, %arg1 : i32, i32
  }
  func.func @transform_2(%arg0: i32, %arg1: i32) -> (i32, i32) {
    %c0_i32 = arith.constant 0 : i32
    %c0_i32_0 = arith.constant 0 : i32
    return %arg0, %c0_i32 : i32, i32
  }
}

</mosaic_0001>

<llo_original>
// kernel: tpu_custom_call.1
$region0: #{tpu_custom_call.1}
  #allocation0 [shape = 'u32[]', space=smem, size = 0x4, offset = 0x4, fixed_abs, tag = 'smem constant byte address 0x4 - core index']
  #allocation1 [shape = 'u32[72,128]{1,0:T(1,128)}', space=vmem, size = 0x9000, scoped, tag = 'internal scratch']
  #allocation2 [shape = 'f32[8,128]{1,0:T(8,128)}', space=vmem, size = 0x1000, scoped, tag = 'scratch operand']
  #allocation3 [shape = 'f32[8,128]{1,0:T(8,128)}', space=vmem, size = 0x1000, scoped, tag = 'scratch operand']
  %s0 = inlined_call_operand.hbm [shape: f32[8,1024], index: 0, kind: input, shape index: {}]
  %s1 = inlined_call_operand.hbm [shape: f32[8,1024], index: 1, kind: input, shape index: {}]
  %s2 = inlined_call_operand.vmem [shape: f32[8,1], index: 2, kind: output, shape index: {}]
  %s3 = sld [smem:[#allocation0]]
  $region34: #{tpu_custom_call.1} parent=0
    _
  %s5 = ssub.s32 1, %s3
  %s6 = scalar_select 0, %s5, %s3
  $region1: #{tpu_custom_call.1} parent=0
    #allocation4 [shape = 'u8[32768]{0}', space=vmem, size = 0x8000, scoped, tag = 'input window, operand 0, single buffered']
    #allocation5 [shape = 's32[1]{0}', space=sflag, size = 0x4, scoped, tag = 'scoped memory for tpu_custom_call.1']
    #allocation6 [shape = 'u8[32768]{0}', space=vmem, size = 0x8000, scoped, tag = 'input window, operand 1, single buffered']
    #allocation7 [shape = 's32[1]{0}', space=sflag, size = 0x4, scoped, tag = 'scoped memory for tpu_custom_call.1']
    %7 = vsyncpa [#allocation5], 0
    %8 = vsyncpa [#allocation7], 0
    // Predicated region
    $region2: #{tpu_custom_call.1} parent=1 // pred_check
      _
    $region3: #{tpu_custom_call.1} parent=1 // pred_check_branch
      %10 = sbr.rel (0) target = $region5
    $region4: #{tpu_custom_call.1} parent=1 // pred_region
      %12 = vsyncadd [#allocation5], 0
      %s14 = sshll.u32 %s0, 4
      %s15 = int_to_ptr.hbm [resolvable:$true] %s14
      %s16 = sshll.u32 [#allocation4], 4
      %s17 = int_to_ptr.vmem [resolvable:$true] %s16
      %19 = dma.hbm_to_vmem [thread:$0]  %s15, 1024, %s17, [#allocation5]
    $region5: #{tpu_custom_call.1} parent=1 // pred_fallthru
      _
    // Predicated region
    $region6: #{tpu_custom_call.1} parent=1 // pred_check
      _
    $region7: #{tpu_custom_call.1} parent=1 // pred_check_branch
      %21 = sbr.rel (0) target = $region9
    $region8: #{tpu_custom_call.1} parent=1 // pred_region
      %23 = vsyncadd [#allocation7], 0
      %s25 = sshll.u32 %s1, 4
      %s26 = int_to_ptr.hbm [resolvable:$true] %s25
      %s27 = sshll.u32 [#allocation6], 4
      %s28 = int_to_ptr.vmem [resolvable:$true] %s27
      %30 = dma.hbm_to_vmem [thread:$0]  %s26, 1024, %s28, [#allocation7]
    $region9: #{tpu_custom_call.1} parent=1 // pred_fallthru
      _
    // Predicated region
    $region10: #{tpu_custom_call.1} parent=1 // pred_check
      _
    $region11: #{tpu_custom_call.1} parent=1 // pred_check_branch
      %32 = sbr.rel (0) target = $region13
    $region12: #{tpu_custom_call.1} parent=1 // pred_region
      %34 = dma.done [#allocation5], 1024
    $region13: #{tpu_custom_call.1} parent=1 // pred_fallthru
      _
    // Predicated region
    $region14: #{tpu_custom_call.1} parent=1 // pred_check
      _
    $region15: #{tpu_custom_call.1} parent=1 // pred_check_branch
      %36 = sbr.rel (0) target = $region17
    $region16: #{tpu_custom_call.1} parent=1 // pred_region
      %38 = dma.done [#allocation7], 1024
    $region17: #{tpu_custom_call.1} parent=1 // pred_fallthru
      _
    %p39 = scmp.eq.s32.totalorder 0, 0
    // Predicated region
    $region18: #{tpu_custom_call.1} parent=1 // pred_check
      %p40 = pneg %p39
    $region19: #{tpu_custom_call.1} parent=1 // pred_check_branch
      %42 = sbr.rel (%p40) target = $region21
    $region20: #{tpu_custom_call.1} parent=1 // pred_region
      %43 = vst [vmem:[#allocation2] sm:$0xff] 0.0
      %44 = vst [vmem:[#allocation3] sm:$0xff] 0.0
    $region21: #{tpu_custom_call.1} parent=1 // pred_fallthru
      _
    %v45 = vld [vmem:[#allocation4] sm:$0xff]
    %v46 = vld [vmem:[#allocation4 + $0x8] sm:$0xff]
    %v47 = vld [vmem:[#allocation4 + $0x10] sm:$0xff]
    %v48 = vld [vmem:[#allocation4 + $0x18] sm:$0xff]
    %v49 = vld [vmem:[#allocation4 + $0x20] sm:$0xff]
    %v50 = vld [vmem:[#allocation4 + $0x28] sm:$0xff]
    %v51 = vld [vmem:[#allocation4 + $0x30] sm:$0xff]
    %v52 = vld [vmem:[#allocation4 + $0x38] sm:$0xff]
    %v53 = vxor.u32 %v45, 2147483648
    %v54 = vxor.u32 %v46, 2147483648
    %v55 = vxor.u32 %v47, 2147483648
    %v56 = vxor.u32 %v48, 2147483648
    %v57 = vxor.u32 %v49, 2147483648
    %v58 = vxor.u32 %v50, 2147483648
    %v59 = vxor.u32 %v51, 2147483648
    %v60 = vxor.u32 %v52, 2147483648
    %v61 = vmul.f32 %v53, 1.442695
    %v62 = vpow.pop %v61
    %v63 = vmul.f32 %v54, 1.442695
    %v64 = vpow.pop %v63
    %v65 = vmul.f32 %v55, 1.442695
    %v66 = vpow.pop %v65
    %v67 = vmul.f32 %v56, 1.442695
    %v68 = vpow.pop %v67
    %v69 = vmul.f32 %v57, 1.442695
    %v70 = vpow.pop %v69
    %v71 = vmul.f32 %v58, 1.442695
    %v72 = vpow.pop %v71
    %v73 = vmul.f32 %v59, 1.442695
    %v74 = vpow.pop %v73
    %v75 = vmul.f32 %v60, 1.442695
    %v76 = vpow.pop %v75
    %v77 = vadd.f32 %v62, 1.0
    %v78 = vadd.f32 %v64, 1.0
    %v79 = vadd.f32 %v66, 1.0
    %v80 = vadd.f32 %v68, 1.0
    %v81 = vadd.f32 %v70, 1.0
    %v82 = vadd.f32 %v72, 1.0
    %v83 = vadd.f32 %v74, 1.0
    %v84 = vadd.f32 %v76, 1.0
    %v85 = vrcp.pop %v77
    %v86 = vmul.f32 %v77, %v85
    %v87 = vsub.f32 1.0, %v86
    %v88 = vmul.f32 %v85, %v87
    %v89 = vadd.f32 %v85, %v88
    %vm90 = vweird.f32 %v77
    %vm91 = vweird.f32 %v85
    %vm92 = vmor %vm90, %vm91
    %v93 = vsel %vm92, %v85, %v89
    %v94 = vand.u32 2147483647, %v77
    %vm95 = vcmp.eq.f32.partialorder %v94, 8.507059e+37
    %v96 = vand.u32 %v77, 2147483648
    %v97 = vor.u32 1.1754944e-38, %v96
    %v98 = vsel %vm95, %v97, %v93
    %v99 = vmul.f32 1.0, %v98
    %v100 = vrcp.pop %v78
    %v101 = vmul.f32 %v78, %v100
    %v102 = vsub.f32 1.0, %v101
    %v103 = vmul.f32 %v100, %v102
    %v104 = vadd.f32 %v100, %v103
    %vm105 = vweird.f32 %v78
    %vm106 = vweird.f32 %v100
    %vm107 = vmor %vm105, %vm106
    %v108 = vsel %vm107, %v100, %v104
    %v109 = vand.u32 2147483647, %v78
    %vm110 = vcmp.eq.f32.partialorder %v109, 8.507059e+37
    %v111 = vand.u32 %v78, 2147483648
    %v112 = vor.u32 1.1754944e-38, %v111
    %v113 = vsel %vm110, %v112, %v108
    %v114 = vmul.f32 1.0, %v113
    %v115 = vrcp.pop %v79
    %v116 = vmul.f32 %v79, %v115
    %v117 = vsub.f32 1.0, %v116
    %v118 = vmul.f32 %v115, %v117
    %v119 = vadd.f32 %v115, %v118
    %vm120 = vweird.f32 %v79
    %vm121 = vweird.f32 %v115
    %vm122 = vmor %vm120, %vm121
    %v123 = vsel %vm122, %v115, %v119
    %v124 = vand.u32 2147483647, %v79
    %vm125 = vcmp.eq.f32.partialorder %v124, 8.507059e+37
    %v126 = vand.u32 %v79, 2147483648
    %v127 = vor.u32 1.1754944e-38, %v126
    %v128 = vsel %vm125, %v127, %v123
    %v129 = vmul.f32 1.0, %v128
    %v130 = vrcp.pop %v80
    %v131 = vmul.f32 %v80, %v130
    %v132 = vsub.f32 1.0, %v131
    %v133 = vmul.f32 %v130, %v132
    %v134 = vadd.f32 %v130, %v133
    %vm135 = vweird.f32 %v80
    %vm136 = vweird.f32 %v130
    %vm137 = vmor %vm135, %vm136
    %v138 = vsel %vm137, %v130, %v134
    %v139 = vand.u32 2147483647, %v80
    %vm140 = vcmp.eq.f32.partialorder %v139, 8.507059e+37
    %v141 = vand.u32 %v80, 2147483648
    %v142 = vor.u32 1.1754944e-38, %v141
    %v143 = vsel %vm140, %v142, %v138
    %v144 = vmul.f32 1.0, %v143
    %v145 = vrcp.pop %v81
    %v146 = vmul.f32 %v81, %v145
    %v147 = vsub.f32 1.0, %v146
    %v148 = vmul.f32 %v145, %v147
    %v149 = vadd.f32 %v145, %v148
    %vm150 = vweird.f32 %v81
    %vm151 = vweird.f32 %v145
    %vm152 = vmor %vm150, %vm151
    %v153 = vsel %vm152, %v145, %v149
    %v154 = vand.u32 2147483647, %v81
    %vm155 = vcmp.eq.f32.partialorder %v154, 8.507059e+37
    %v156 = vand.u32 %v81, 2147483648
    %v157 = vor.u32 1.1754944e-38, %v156
    %v158 = vsel %vm155, %v157, %v153
    %v159 = vmul.f32 1.0, %v158
    %v160 = vrcp.pop %v82
    %v161 = vmul.f32 %v82, %v160
    %v162 = vsub.f32 1.0, %v161
    %v163 = vmul.f32 %v160, %v162
    %v164 = vadd.f32 %v160, %v163
    %vm165 = vweird.f32 %v82
    %vm166 = vweird.f32 %v160
    %vm167 = vmor %vm165, %vm166
    %v168 = vsel %vm167, %v160, %v164
    %v169 = vand.u32 2147483647, %v82
    %vm170 = vcmp.eq.f32.partialorder %v169, 8.507059e+37
    %v171 = vand.u32 %v82, 2147483648
    %v172 = vor.u32 1.1754944e-38, %v171
    %v173 = vsel %vm170, %v172, %v168
    %v174 = vmul.f32 1.0, %v173
    %v175 = vrcp.pop %v83
    %v176 = vmul.f32 %v83, %v175
    %v177 = vsub.f32 1.0, %v176
    %v178 = vmul.f32 %v175, %v177
    %v179 = vadd.f32 %v175, %v178
    %vm180 = vweird.f32 %v83
    %vm181 = vweird.f32 %v175
    %vm182 = vmor %vm180, %vm181
    %v183 = vsel %vm182, %v175, %v179
    %v184 = vand.u32 2147483647, %v83
    %vm185 = vcmp.eq.f32.partialorder %v184, 8.507059e+37
    %v186 = vand.u32 %v83, 2147483648
    %v187 = vor.u32 1.1754944e-38, %v186
    %v188 = vsel %vm185, %v187, %v183
    %v189 = vmul.f32 1.0, %v188
    %v190 = vrcp.pop %v84
    %v191 = vmul.f32 %v84, %v190
    %v192 = vsub.f32 1.0, %v191
    %v193 = vmul.f32 %v190, %v192
    %v194 = vadd.f32 %v190, %v193
    %vm195 = vweird.f32 %v84
    %vm196 = vweird.f32 %v190
    %vm197 = vmor %vm195, %vm196
    %v198 = vsel %vm197, %v190, %v194
    %v199 = vand.u32 2147483647, %v84
    %vm200 = vcmp.eq.f32.partialorder %v199, 8.507059e+37
    %v201 = vand.u32 %v84, 2147483648
    %v202 = vor.u32 1.1754944e-38, %v201
    %v203 = vsel %vm200, %v202, %v198
    %v204 = vmul.f32 1.0, %v203
    %v205 = vld [vmem:[#allocation6] sm:$0xff]
    %v206 = vld [vmem:[#allocation6 + $0x8] sm:$0xff]
    %v207 = vld [vmem:[#allocation6 + $0x10] sm:$0xff]
    %v208 = vld [vmem:[#allocation6 + $0x18] sm:$0xff]
    %v209 = vld [vmem:[#allocation6 + $0x20] sm:$0xff]
    %v210 = vld [vmem:[#allocation6 + $0x28] sm:$0xff]
    %v211 = vld [vmem:[#allocation6 + $0x30] sm:$0xff]
    %v212 = vld [vmem:[#allocation6 + $0x38] sm:$0xff]
    %v213 = vld [vmem:[#allocation2] sm:$0xff]
    %v214 = vmul.f32 %v99, %v205
    %v215 = vmul.f32 %v114, %v206
    %v216 = vmul.f32 %v129, %v207
    %v217 = vmul.f32 %v144, %v208
    %v218 = vmul.f32 %v159, %v209
    %v219 = vmul.f32 %v174, %v210
    %v220 = vmul.f32 %v189, %v211
    %v221 = vmul.f32 %v204, %v212
    %v222 = vadd.f32 %v214, %v215
    %v223 = vadd.f32 %v222, %v216
    %v224 = vadd.f32 %v223, %v217
    %v225 = vadd.f32 %v224, %v218
    %v226 = vadd.f32 %v225, %v219
    %v227 = vadd.f32 %v226, %v220
    %v228 = vadd.f32 %v227, %v221
    %v229 = vadd.f32 %v213, %v228
    %230 = vst [vmem:[#allocation2] sm:$0xff] %v229
    %v231 = vld [vmem:[#allocation3] sm:$0xff]
    %v232 = vadd.f32 %v99, %v205
    %v233 = vadd.f32 %v114, %v206
    %v234 = vadd.f32 %v129, %v207
    %v235 = vadd.f32 %v144, %v208
    %v236 = vadd.f32 %v159, %v209
    %v237 = vadd.f32 %v174, %v210
    %v238 = vadd.f32 %v189, %v211
    %v239 = vadd.f32 %v204, %v212
    %v240 = vadd.f32 %v232, %v233
    %v241 = vadd.f32 %v240, %v234
    %v242 = vadd.f32 %v241, %v235
    %v243 = vadd.f32 %v242, %v236
    %v244 = vadd.f32 %v243, %v237
    %v245 = vadd.f32 %v244, %v238
    %v246 = vadd.f32 %v245, %v239
    %v247 = vadd.f32 %v231, %v246
    %248 = vst [vmem:[#allocation3] sm:$0xff] %v247
    // Predicated region
    $region22: #{tpu_custom_call.1} parent=1 // pred_check
      %p249 = pneg %p39
    $region23: #{tpu_custom_call.1} parent=1 // pred_check_branch
      %251 = sbr.rel (%p249) target = $region25
    $region24: #{tpu_custom_call.1} parent=1 // pred_region
      %v252 = vld [vmem:[#allocation2] sm:$0xff]
      %253 = vadd.xlane.f32.xlu0 %v252
      %v254 = vpop.xlane.xlu0 %253
      %v255 = vld [vmem:[#allocation3] sm:$0xff]
      %256 = vadd.xlane.f32.xlu0 %v255
      %v257 = vpop.xlane.xlu0 %256
      %v258 = vmul.f32 %v254, 2.0
      %v259 = vadd.f32 %v258, 1.0
      %v260 = vadd.f32 %v257, 1.0
      %v261 = vrcp.pop %v260
      %v262 = vmul.f32 %v260, %v261
      %v263 = vsub.f32 1.0, %v262
      %v264 = vmul.f32 %v261, %v263
      %v265 = vadd.f32 %v261, %v264
      %vm266 = vweird.f32 %v260
      %vm267 = vweird.f32 %v261
      %vm268 = vmor %vm266, %vm267
      %v269 = vsel %vm268, %v261, %v265
      %v270 = vand.u32 2147483647, %v260
      %vm271 = vcmp.eq.f32.partialorder %v270, 8.507059e+37
      %v272 = vand.u32 %v260, 2147483648
      %v273 = vor.u32 1.1754944e-38, %v272
      %v274 = vsel %vm271, %v273, %v269
      %v275 = vmul.f32 %v259, %v274
      %v276 = vsub.f32 1.0, %v275
      %vm277 = vcmask 7168
      %278 = vst.msk [vmem:[%s2] sm:$0xff] %vm277, %v276
    $region25: #{tpu_custom_call.1} parent=1 // pred_fallthru
      _
    // Predicated region
    $region26: #{tpu_custom_call.1} parent=1 // pred_check
      _
    $region27: #{tpu_custom_call.1} parent=1 // pred_check_branch
      %280 = sbr.rel (0) target = $region29
    $region28: #{tpu_custom_call.1} parent=1 // pred_region
      _
    $region29: #{tpu_custom_call.1} parent=1 // pred_fallthru
      _
    // Predicated region
    $region30: #{tpu_custom_call.1} parent=1 // pred_check
      _
    $region31: #{tpu_custom_call.1} parent=1 // pred_check_branch
      %282 = sbr.rel (0) target = $region33
    $region32: #{tpu_custom_call.1} parent=1 // pred_region
      _
    $region33: #{tpu_custom_call.1} parent=1 // pred_fallthru
      _
    %283 = vsyncpa [#allocation5], 1
    %284 = vsyncpa [#allocation7], 1

</llo_original>
